<compile_context>
chip_gen: v6e
topology: v6e:2x2x1
jax: 0.10.0
libtpu: 0.0.40
codegen_flags: <defaults>
</compile_context>

<pallas_src>
import functools

import jax
import jax.numpy as jnp
from jax.experimental import pallas as pl
from jax.experimental.pallas import tpu as pltpu


# q1 * conj(q2):  out[c] = sum_t SIGN[t][c] * q1[t] * q2[PERM[t][c]]
_PERM = ((0, 1, 2, 3),
         (1, 0, 3, 2),
         (2, 3, 0, 1),
         (3, 2, 1, 0))
_SIGN = ((1.0, -1.0, -1.0, -1.0),
         (1.0,  1.0,  1.0, -1.0),
         (1.0, -1.0,  1.0,  1.0),
         (1.0,  1.0, -1.0,  1.0))


def _round_up(x, m):
    return (x + m - 1) // m * m


def _cdiv(a, b):
    return (a + b - 1) // b


def _quat_prod_prior_kernel(inp_ref, out_ref, *, K, L):
    """Edge axis is the lane (last) dimension; all blocks are (rows, e_blk).

    inp_ref rows:
      [0       , 4K)       x_i components,  row = t*K + k   (t = quaternion component)
      [4K      , 5K)       w_i,             row = 4K + k
      [5K      , 5K + 4L)  x_j components,  row = 5K + p*L + l
      [5K + 4L , 5K + 5L)  w_j,             row = 5K + 4L + l

    out_ref rows:
      [0       , 4*L*K)    ratios: row = (l*4 + c)*K + k  ->  (q_i(k) * conj(q_j(l)))_c
      [4*L*K   , 5*L*K)    weights: row = 4*L*K + l*K + k ->  w_i[k] * w_j[l]
    """
    e_blk = inp_ref.shape[-1]
    xj_base = 5 * K
    wj_base = 5 * K + 4 * L
    rat_rows = 4 * L * K

    # Dense (K, e_blk) component tiles of x_i and the w_i tile (full vregs, plain vld).
    xi = [inp_ref[pl.ds(t * K, K), :] for t in range(4)]
    wi = inp_ref[pl.ds(4 * K, K), :]

    for l in range(L):
        # Hoisted sublane broadcasts of x_j / w_j rows for particle l:
        # one (1, e_blk) -> (K, e_blk) broadcast per row, reused across all components.
        xj_b = [jnp.broadcast_to(inp_ref[pl.ds(xj_base + p * L + l, 1), :], (K, e_blk))
                for p in range(4)]
        for c in range(4):
            # Order terms so the first has +1 sign; remaining signs fold into add/sub
            # (pure VPU FMA-style work on fully packed vregs, no sign multiplies).
            order = sorted(range(4), key=lambda t: -_SIGN[t][c])
            t0 = order[0]
            acc = xi[t0] * xj_b[_PERM[t0][c]]
            for t in order[1:]:
                term = xi[t] * xj_b[_PERM[t][c]]
                acc = acc + term if _SIGN[t][c] > 0.0 else acc - term
            out_ref[pl.ds((l * 4 + c) * K, K), :] = acc

        wj_b = jnp.broadcast_to(inp_ref[pl.ds(wj_base + l, 1), :], (K, e_blk))
        out_ref[pl.ds(rat_rows + l * K, K), :] = wi * wj_b


@functools.partial(jax.jit, static_argnames=("edge_block",))
def quaternion_relative_measure_map_weights_product_prior(
        particles, weights, edges, *, edge_block=2048):
    """particles: (M, K, 4) f32, weights: (M, K) f32, edges: (N, 2) int.

    Returns (ratios (N, K*K, 4), RM_weights (N, K*K)) matching the torch forward.
    """
    M, K, _ = particles.shape
    L = K                               # x_i and x_j come from the same particle set
    N = edges.shape[0]

    particles = particles.astype(jnp.float32)
    weights = weights.astype(jnp.float32)
    ei = edges[:, 0].astype(jnp.int32)
    ej = edges[:, 1].astype(jnp.int32)

    # Cheap XLA-side pre-gather (inputs are ~1/L of the output size), then transpose so
    # the big edge axis is the lane (last) dimension of every kernel operand.
    xi_t = jnp.transpose(jnp.take(particles, ei, axis=0), (2, 1, 0)).reshape(4 * K, N)
    xj_t = jnp.transpose(jnp.take(particles, ej, axis=0), (2, 1, 0)).reshape(4 * L, N)
    wi_t = jnp.transpose(jnp.take(weights, ei, axis=0), (1, 0))     # (K, N)
    wj_t = jnp.transpose(jnp.take(weights, ej, axis=0), (1, 0))     # (L, N)
    inp = jnp.concatenate([xi_t, wi_t, xj_t, wj_t], axis=0)         # (5K + 5L, N)

    # Lane-blocked grid over edges: block is a multiple of 128 lanes, capped so small
    # problems still get >= ~4 grid steps (lets the "parallel" axis feed both v7x TCs).
    e_blk = max(128, min(_round_up(edge_block, 128), _round_up(_cdiv(N, 4), 128)))
    n_pad = _round_up(N, e_blk)
    if n_pad != N:
        inp = jnp.pad(inp, ((0, 0), (0, n_pad - N)))

    in_rows = 5 * K + 5 * L
    out_rows = 5 * K * L        # fused output: 4*K*L ratio rows + K*L weight rows

    out_t = pl.pallas_call(
        functools.partial(_quat_prod_prior_kernel, K=K, L=L),
        out_shape=jax.ShapeDtypeStruct((out_rows, n_pad), jnp.float32),
        grid_spec=pltpu.PrefetchScalarGridSpec(
            num_scalar_prefetch=0,
            grid=(n_pad // e_blk,),
            in_specs=[pl.BlockSpec((in_rows, e_blk), lambda b: (0, b))],
            out_specs=pl.BlockSpec((out_rows, e_blk), lambda b: (0, b)),
        ),
        compiler_params=pltpu.CompilerParams(
            dimension_semantics=("parallel",),   # independent edge blocks -> both v7x TCs
        ),
    )(inp)

    # Back to the shapes the torch module returns; these are plain XLA transposes of
    # dense data outside the kernel (the kernel itself only does dense 128-lane I/O).
    ratios = jnp.transpose(
        out_t[:4 * L * K, :N].reshape(L, 4, K, N), (3, 2, 0, 1)).reshape(N, K * L, 4)
    RM_weights = jnp.transpose(
        out_t[4 * L * K:, :N].reshape(L, K, N), (2, 1, 0)).reshape(N, K * L)
    return ratios, RM_weights


def _reference(particles, weights, edges):
    """Pure-JAX reference matching the PyTorch forward."""
    ei = edges[:, 0]
    ej = edges[:, 1]
    xi = particles[ei]                      # (N, K, 4)
    xj = particles[ej]                      # (N, L, 4)
    w1, x1, y1, z1 = [xi[:, :, None, c] for c in range(4)]   # (N, K, 1)
    w2, x2, y2, z2 = [xj[:, None, :, c] for c in range(4)]   # (N, 1, L)
    qw = w1 * w2 + x1 * x2 + y1 * y2 + z1 * z2
    qx = -w1 * x2 + x1 * w2 - y1 * z2 + z1 * y2
    qy = -w1 * y2 + x1 * z2 + y1 * w2 - z1 * x2
    qz = -w1 * z2 - x1 * y2 + y1 * x2 + z1 * w2
    prod = jnp.stack([qw, qx, qy, qz], axis=-1)               # (N, K, L, 4)
    N, K, L, _ = prod.shape
    ratios = jnp.transpose(
        jnp.transpose(prod, (0, 3, 1, 2)).reshape(N, 4, K * L), (0, 2, 1))
    rmw = jnp.einsum('nk,nl->nkl', weights[ei], weights[ej]).reshape(N, K * L)
    return ratios, rmw


if __name__ == "__main__":
    key = jax.random.PRNGKey(0)
    k1, k2, k3, k4, k5 = jax.random.split(key, 5)

    # --- small deterministic pose graph (matches the module's typical use) ---
    M, K = 5, 8
    particles = jax.random.normal(k1, (M, K, 4), dtype=jnp.float32)
    particles = particles / jnp.linalg.norm(particles, axis=-1, keepdims=True)
    weights = jax.nn.softmax(jax.random.normal(k2, (M, K), dtype=jnp.float32), axis=-1)
    edges = jnp.array([[0, 1], [1, 2], [2, 3], [3, 4], [4, 0], [0, 2]], dtype=jnp.int32)

    ratios, rm_weights = quaternion_relative_measure_map_weights_product_prior(
        particles, weights, edges)
    jax.block_until_ready((ratios, rm_weights))

    ratios_ref, rmw_ref = _reference(particles, weights, edges)
    assert ratios.shape == (edges.shape[0], K * K, 4)
    assert rm_weights.shape == (edges.shape[0], K * K)
    assert jnp.allclose(ratios, ratios_ref, atol=1e-5, rtol=1e-5)
    assert jnp.allclose(rm_weights, rmw_ref, atol=1e-5, rtol=1e-5)

    # --- larger random edge set: exercises the multi-block (grid > 1) path ---
    M2, N2 = 64, 1000
    particles2 = jax.random.normal(k3, (M2, K, 4), dtype=jnp.float32)
    particles2 = particles2 / jnp.linalg.norm(particles2, axis=-1, keepdims=True)
    weights2 = jax.nn.softmax(jax.random.normal(k4, (M2, K), dtype=jnp.float32), axis=-1)
    edges2 = jax.random.randint(k5, (N2, 2), 0, M2, dtype=jnp.int32)

    ratios2, rmw2 = quaternion_relative_measure_map_weights_product_prior(
        particles2, weights2, edges2)
    jax.block_until_ready((ratios2, rmw2))

    ratios2_ref, rmw2_ref = _reference(particles2, weights2, edges2)
    assert jnp.allclose(ratios2, ratios2_ref, atol=1e-5, rtol=1e-5)
    assert jnp.allclose(rmw2, rmw2_ref, atol=1e-5, rtol=1e-5)

    print("KERNEL_OK")
</pallas_src>

<mosaic_0001>
module attributes {stable_mosaic.version = 11 : i64} {
  func.func @_quat_prod_prior_kernel(%arg0: i32, %arg1: memref<80x128xf32, #tpu.memory_space<vmem>>, %arg2: memref<320x128xf32, #tpu.memory_space<vmem>>) attributes {dimension_semantics = [#tpu.dimension_semantics<parallel>], iteration_bounds = array<i64: 1>, scalar_prefetch = 0 : i64, scratch_operands = 0 : i64, tpu.core_type = #tpu.core_type<tc>, window_params = [{transform_indices = @transform_0, window_bounds = array<i64: 80, 128>}, {transform_indices = @transform_1, window_bounds = array<i64: 320, 128>}]} {
    %c0 = arith.constant 0 : index
    %c0_0 = arith.constant 0 : index
    %0 = vector.load %arg1[%c0, %c0_0] : memref<80x128xf32, #tpu.memory_space<vmem>>, vector<8x128xf32>
    %c8 = arith.constant 8 : index
    %c0_1 = arith.constant 0 : index
    %1 = vector.load %arg1[%c8, %c0_1] : memref<80x128xf32, #tpu.memory_space<vmem>>, vector<8x128xf32>
    %c16 = arith.constant 16 : index
    %c0_2 = arith.constant 0 : index
    %2 = vector.load %arg1[%c16, %c0_2] : memref<80x128xf32, #tpu.memory_space<vmem>>, vector<8x128xf32>
    %c24 = arith.constant 24 : index
    %c0_3 = arith.constant 0 : index
    %3 = vector.load %arg1[%c24, %c0_3] : memref<80x128xf32, #tpu.memory_space<vmem>>, vector<8x128xf32>
    %c32 = arith.constant 32 : index
    %c0_4 = arith.constant 0 : index
    %4 = vector.load %arg1[%c32, %c0_4] : memref<80x128xf32, #tpu.memory_space<vmem>>, vector<8x128xf32>
    %c40 = arith.constant 40 : index
    %c0_5 = arith.constant 0 : index
    %5 = vector.load %arg1[%c40, %c0_5] : memref<80x128xf32, #tpu.memory_space<vmem>>, vector<1x128xf32>
    %6 = vector.shape_cast %5 : vector<1x128xf32> to vector<1x128xf32>
    %7 = vector.broadcast %6 : vector<1x128xf32> to vector<8x128xf32>
    %c48 = arith.constant 48 : index
    %c0_6 = arith.constant 0 : index
    %8 = vector.load %arg1[%c48, %c0_6] : memref<80x128xf32, #tpu.memory_space<vmem>>, vector<1x128xf32>
    %9 = vector.shape_cast %8 : vector<1x128xf32> to vector<1x128xf32>
    %10 = vector.broadcast %9 : vector<1x128xf32> to vector<8x128xf32>
    %c56 = arith.constant 56 : index
    %c0_7 = arith.constant 0 : index
    %11 = vector.load %arg1[%c56, %c0_7] : memref<80x128xf32, #tpu.memory_space<vmem>>, vector<1x128xf32>
    %12 = vector.shape_cast %11 : vector<1x128xf32> to vector<1x128xf32>
    %13 = vector.broadcast %12 : vector<1x128xf32> to vector<8x128xf32>
    %c64 = arith.constant 64 : index
    %c0_8 = arith.constant 0 : index
    %14 = vector.load %arg1[%c64, %c0_8] : memref<80x128xf32, #tpu.memory_space<vmem>>, vector<1x128xf32>
    %15 = vector.shape_cast %14 : vector<1x128xf32> to vector<1x128xf32>
    %16 = vector.broadcast %15 : vector<1x128xf32> to vector<8x128xf32>
    %17 = arith.mulf %0, %7 : vector<8x128xf32>
    %18 = arith.mulf %1, %10 : vector<8x128xf32>
    %19 = arith.addf %17, %18 : vector<8x128xf32>
    %20 = arith.mulf %2, %13 : vector<8x128xf32>
    %21 = arith.addf %19, %20 : vector<8x128xf32>
    %22 = arith.mulf %3, %16 : vector<8x128xf32>
    %23 = arith.addf %21, %22 : vector<8x128xf32>
    %c0_9 = arith.constant 0 : index
    %c0_10 = arith.constant 0 : index
    %24 = vector.load %arg2[%c0_9, %c0_10] : memref<320x128xf32, #tpu.memory_space<vmem>>, vector<8x128xf32>
    tpu.vector_store %arg2[%c0_9, %c0_10], %23 {strides = array<i32>} : memref<320x128xf32, #tpu.memory_space<vmem>>, vector<8x128xf32>,
    %25 = arith.mulf %1, %7 : vector<8x128xf32>
    %26 = arith.mulf %3, %13 : vector<8x128xf32>
    %27 = arith.addf %25, %26 : vector<8x128xf32>
    %28 = arith.mulf %0, %10 : vector<8x128xf32>
    %29 = arith.subf %27, %28 : vector<8x128xf32>
    %30 = arith.mulf %2, %16 : vector<8x128xf32>
    %31 = arith.subf %29, %30 : vector<8x128xf32>
    %c8_11 = arith.constant 8 : index
    %c0_12 = arith.constant 0 : index
    %32 = vector.load %arg2[%c8_11, %c0_12] : memref<320x128xf32, #tpu.memory_space<vmem>>, vector<8x128xf32>
    tpu.vector_store %arg2[%c8_11, %c0_12], %31 {strides = array<i32>} : memref<320x128xf32, #tpu.memory_space<vmem>>, vector<8x128xf32>,
    %33 = arith.mulf %1, %16 : vector<8x128xf32>
    %34 = arith.mulf %2, %7 : vector<8x128xf32>
    %35 = arith.addf %33, %34 : vector<8x128xf32>
    %36 = arith.mulf %0, %13 : vector<8x128xf32>
    %37 = arith.subf %35, %36 : vector<8x128xf32>
    %38 = arith.mulf %3, %10 : vector<8x128xf32>
    %39 = arith.subf %37, %38 : vector<8x128xf32>
    %c16_13 = arith.constant 16 : index
    %c0_14 = arith.constant 0 : index
    %40 = vector.load %arg2[%c16_13, %c0_14] : memref<320x128xf32, #tpu.memory_space<vmem>>, vector<8x128xf32>
    tpu.vector_store %arg2[%c16_13, %c0_14], %39 {strides = array<i32>} : memref<320x128xf32, #tpu.memory_space<vmem>>, vector<8x128xf32>,
    %41 = arith.mulf %2, %10 : vector<8x128xf32>
    %42 = arith.mulf %3, %7 : vector<8x128xf32>
    %43 = arith.addf %41, %42 : vector<8x128xf32>
    %44 = arith.mulf %0, %16 : vector<8x128xf32>
    %45 = arith.subf %43, %44 : vector<8x128xf32>
    %46 = arith.mulf %1, %13 : vector<8x128xf32>
    %47 = arith.subf %45, %46 : vector<8x128xf32>
    %c24_15 = arith.constant 24 : index
    %c0_16 = arith.constant 0 : index
    %48 = vector.load %arg2[%c24_15, %c0_16] : memref<320x128xf32, #tpu.memory_space<vmem>>, vector<8x128xf32>
    tpu.vector_store %arg2[%c24_15, %c0_16], %47 {strides = array<i32>} : memref<320x128xf32, #tpu.memory_space<vmem>>, vector<8x128xf32>,
    %c72 = arith.constant 72 : index
    %c0_17 = arith.constant 0 : index
    %49 = vector.load %arg1[%c72, %c0_17] : memref<80x128xf32, #tpu.memory_space<vmem>>, vector<1x128xf32>
    %50 = vector.shape_cast %49 : vector<1x128xf32> to vector<1x128xf32>
    %51 = vector.broadcast %50 : vector<1x128xf32> to vector<8x128xf32>
    %52 = arith.mulf %4, %51 : vector<8x128xf32>
    %c256 = arith.constant 256 : index
    %c0_18 = arith.constant 0 : index
    %53 = vector.load %arg2[%c256, %c0_18] : memref<320x128xf32, #tpu.memory_space<vmem>>, vector<8x128xf32>
    tpu.vector_store %arg2[%c256, %c0_18], %52 {strides = array<i32>} : memref<320x128xf32, #tpu.memory_space<vmem>>, vector<8x128xf32>,
    %c41 = arith.constant 41 : index
    %c0_19 = arith.constant 0 : index
    %54 = vector.load %arg1[%c41, %c0_19] : memref<80x128xf32, #tpu.memory_space<vmem>>, vector<1x128xf32>
    %55 = vector.shape_cast %54 : vector<1x128xf32> to vector<1x128xf32>
    %56 = vector.broadcast %55 : vector<1x128xf32> to vector<8x128xf32>
    %c49 = arith.constant 49 : index
    %c0_20 = arith.constant 0 : index
    %57 = vector.load %arg1[%c49, %c0_20] : memref<80x128xf32, #tpu.memory_space<vmem>>, vector<1x128xf32>
    %58 = vector.shape_cast %57 : vector<1x128xf32> to vector<1x128xf32>
    %59 = vector.broadcast %58 : vector<1x128xf32> to vector<8x128xf32>
    %c57 = arith.constant 57 : index
    %c0_21 = arith.constant 0 : index
    %60 = vector.load %arg1[%c57, %c0_21] : memref<80x128xf32, #tpu.memory_space<vmem>>, vector<1x128xf32>
    %61 = vector.shape_cast %60 : vector<1x128xf32> to vector<1x128xf32>
    %62 = vector.broadcast %61 : vector<1x128xf32> to vector<8x128xf32>
    %c65 = arith.constant 65 : index
    %c0_22 = arith.constant 0 : index
    %63 = vector.load %arg1[%c65, %c0_22] : memref<80x128xf32, #tpu.memory_space<vmem>>, vector<1x128xf32>
    %64 = vector.shape_cast %63 : vector<1x128xf32> to vector<1x128xf32>
    %65 = vector.broadcast %64 : vector<1x128xf32> to vector<8x128xf32>
    %66 = arith.mulf %0, %56 : vector<8x128xf32>
    %67 = arith.mulf %1, %59 : vector<8x128xf32>
    %68 = arith.addf %66, %67 : vector<8x128xf32>
    %69 = arith.mulf %2, %62 : vector<8x128xf32>
    %70 = arith.addf %68, %69 : vector<8x128xf32>
    %71 = arith.mulf %3, %65 : vector<8x128xf32>
    %72 = arith.addf %70, %71 : vector<8x128xf32>
    %c32_23 = arith.constant 32 : index
    %c0_24 = arith.constant 0 : index
    %73 = vector.load %arg2[%c32_23, %c0_24] : memref<320x128xf32, #tpu.memory_space<vmem>>, vector<8x128xf32>
    tpu.vector_store %arg2[%c32_23, %c0_24], %72 {strides = array<i32>} : memref<320x128xf32, #tpu.memory_space<vmem>>, vector<8x128xf32>,
    %74 = arith.mulf %1, %56 : vector<8x128xf32>
    %75 = arith.mulf %3, %62 : vector<8x128xf32>
    %76 = arith.addf %74, %75 : vector<8x128xf32>
    %77 = arith.mulf %0, %59 : vector<8x128xf32>
    %78 = arith.subf %76, %77 : vector<8x128xf32>
    %79 = arith.mulf %2, %65 : vector<8x128xf32>
    %80 = arith.subf %78, %79 : vector<8x128xf32>
    %c40_25 = arith.constant 40 : index
    %c0_26 = arith.constant 0 : index
    %81 = vector.load %arg2[%c40_25, %c0_26] : memref<320x128xf32, #tpu.memory_space<vmem>>, vector<8x128xf32>
    tpu.vector_store %arg2[%c40_25, %c0_26], %80 {strides = array<i32>} : memref<320x128xf32, #tpu.memory_space<vmem>>, vector<8x128xf32>,
    %82 = arith.mulf %1, %65 : vector<8x128xf32>
    %83 = arith.mulf %2, %56 : vector<8x128xf32>
    %84 = arith.addf %82, %83 : vector<8x128xf32>
    %85 = arith.mulf %0, %62 : vector<8x128xf32>
    %86 = arith.subf %84, %85 : vector<8x128xf32>
    %87 = arith.mulf %3, %59 : vector<8x128xf32>
    %88 = arith.subf %86, %87 : vector<8x128xf32>
    %c48_27 = arith.constant 48 : index
    %c0_28 = arith.constant 0 : index
    %89 = vector.load %arg2[%c48_27, %c0_28] : memref<320x128xf32, #tpu.memory_space<vmem>>, vector<8x128xf32>
    tpu.vector_store %arg2[%c48_27, %c0_28], %88 {strides = array<i32>} : memref<320x128xf32, #tpu.memory_space<vmem>>, vector<8x128xf32>,
    %90 = arith.mulf %2, %59 : vector<8x128xf32>
    %91 = arith.mulf %3, %56 : vector<8x128xf32>
    %92 = arith.addf %90, %91 : vector<8x128xf32>
    %93 = arith.mulf %0, %65 : vector<8x128xf32>
    %94 = arith.subf %92, %93 : vector<8x128xf32>
    %95 = arith.mulf %1, %62 : vector<8x128xf32>
    %96 = arith.subf %94, %95 : vector<8x128xf32>
    %c56_29 = arith.constant 56 : index
    %c0_30 = arith.constant 0 : index
    %97 = vector.load %arg2[%c56_29, %c0_30] : memref<320x128xf32, #tpu.memory_space<vmem>>, vector<8x128xf32>
    tpu.vector_store %arg2[%c56_29, %c0_30], %96 {strides = array<i32>} : memref<320x128xf32, #tpu.memory_space<vmem>>, vector<8x128xf32>,
    %c73 = arith.constant 73 : index
    %c0_31 = arith.constant 0 : index
    %98 = vector.load %arg1[%c73, %c0_31] : memref<80x128xf32, #tpu.memory_space<vmem>>, vector<1x128xf32>
    %99 = vector.shape_cast %98 : vector<1x128xf32> to vector<1x128xf32>
    %100 = vector.broadcast %99 : vector<1x128xf32> to vector<8x128xf32>
    %101 = arith.mulf %4, %100 : vector<8x128xf32>
    %c264 = arith.constant 264 : index
    %c0_32 = arith.constant 0 : index
    %102 = vector.load %arg2[%c264, %c0_32] : memref<320x128xf32, #tpu.memory_space<vmem>>, vector<8x128xf32>
    tpu.vector_store %arg2[%c264, %c0_32], %101 {strides = array<i32>} : memref<320x128xf32, #tpu.memory_space<vmem>>, vector<8x128xf32>,
    %c42 = arith.constant 42 : index
    %c0_33 = arith.constant 0 : index
    %103 = vector.load %arg1[%c42, %c0_33] : memref<80x128xf32, #tpu.memory_space<vmem>>, vector<1x128xf32>
    %104 = vector.shape_cast %103 : vector<1x128xf32> to vector<1x128xf32>
    %105 = vector.broadcast %104 : vector<1x128xf32> to vector<8x128xf32>
    %c50 = arith.constant 50 : index
    %c0_34 = arith.constant 0 : index
    %106 = vector.load %arg1[%c50, %c0_34] : memref<80x128xf32, #tpu.memory_space<vmem>>, vector<1x128xf32>
    %107 = vector.shape_cast %106 : vector<1x128xf32> to vector<1x128xf32>
    %108 = vector.broadcast %107 : vector<1x128xf32> to vector<8x128xf32>
    %c58 = arith.constant 58 : index
    %c0_35 = arith.constant 0 : index
    %109 = vector.load %arg1[%c58, %c0_35] : memref<80x128xf32, #tpu.memory_space<vmem>>, vector<1x128xf32>
    %110 = vector.shape_cast %109 : vector<1x128xf32> to vector<1x128xf32>
    %111 = vector.broadcast %110 : vector<1x128xf32> to vector<8x128xf32>
    %c66 = arith.constant 66 : index
    %c0_36 = arith.constant 0 : index
    %112 = vector.load %arg1[%c66, %c0_36] : memref<80x128xf32, #tpu.memory_space<vmem>>, vector<1x128xf32>
    %113 = vector.shape_cast %112 : vector<1x128xf32> to vector<1x128xf32>
    %114 = vector.broadcast %113 : vector<1x128xf32> to vector<8x128xf32>
    %115 = arith.mulf %0, %105 : vector<8x128xf32>
    %116 = arith.mulf %1, %108 : vector<8x128xf32>
    %117 = arith.addf %115, %116 : vector<8x128xf32>
    %118 = arith.mulf %2, %111 : vector<8x128xf32>
    %119 = arith.addf %117, %118 : vector<8x128xf32>
    %120 = arith.mulf %3, %114 : vector<8x128xf32>
    %121 = arith.addf %119, %120 : vector<8x128xf32>
    %c64_37 = arith.constant 64 : index
    %c0_38 = arith.constant 0 : index
    %122 = vector.load %arg2[%c64_37, %c0_38] : memref<320x128xf32, #tpu.memory_space<vmem>>, vector<8x128xf32>
    tpu.vector_store %arg2[%c64_37, %c0_38], %121 {strides = array<i32>} : memref<320x128xf32, #tpu.memory_space<vmem>>, vector<8x128xf32>,
    %123 = arith.mulf %1, %105 : vector<8x128xf32>
    %124 = arith.mulf %3, %111 : vector<8x128xf32>
    %125 = arith.addf %123, %124 : vector<8x128xf32>
    %126 = arith.mulf %0, %108 : vector<8x128xf32>
    %127 = arith.subf %125, %126 : vector<8x128xf32>
    %128 = arith.mulf %2, %114 : vector<8x128xf32>
    %129 = arith.subf %127, %128 : vector<8x128xf32>
    %c72_39 = arith.constant 72 : index
    %c0_40 = arith.constant 0 : index
    %130 = vector.load %arg2[%c72_39, %c0_40] : memref<320x128xf32, #tpu.memory_space<vmem>>, vector<8x128xf32>
    tpu.vector_store %arg2[%c72_39, %c0_40], %129 {strides = array<i32>} : memref<320x128xf32, #tpu.memory_space<vmem>>, vector<8x128xf32>,
    %131 = arith.mulf %1, %114 : vector<8x128xf32>
    %132 = arith.mulf %2, %105 : vector<8x128xf32>
    %133 = arith.addf %131, %132 : vector<8x128xf32>
    %134 = arith.mulf %0, %111 : vector<8x128xf32>
    %135 = arith.subf %133, %134 : vector<8x128xf32>
    %136 = arith.mulf %3, %108 : vector<8x128xf32>
    %137 = arith.subf %135, %136 : vector<8x128xf32>
    %c80 = arith.constant 80 : index
    %c0_41 = arith.constant 0 : index
    %138 = vector.load %arg2[%c80, %c0_41] : memref<320x128xf32, #tpu.memory_space<vmem>>, vector<8x128xf32>
    tpu.vector_store %arg2[%c80, %c0_41], %137 {strides = array<i32>} : memref<320x128xf32, #tpu.memory_space<vmem>>, vector<8x128xf32>,
    %139 = arith.mulf %2, %108 : vector<8x128xf32>
    %140 = arith.mulf %3, %105 : vector<8x128xf32>
    %141 = arith.addf %139, %140 : vector<8x128xf32>
    %142 = arith.mulf %0, %114 : vector<8x128xf32>
    %143 = arith.subf %141, %142 : vector<8x128xf32>
    %144 = arith.mulf %1, %111 : vector<8x128xf32>
    %145 = arith.subf %143, %144 : vector<8x128xf32>
    %c88 = arith.constant 88 : index
    %c0_42 = arith.constant 0 : index
    %146 = vector.load %arg2[%c88, %c0_42] : memref<320x128xf32, #tpu.memory_space<vmem>>, vector<8x128xf32>
    tpu.vector_store %arg2[%c88, %c0_42], %145 {strides = array<i32>} : memref<320x128xf32, #tpu.memory_space<vmem>>, vector<8x128xf32>,
    %c74 = arith.constant 74 : index
    %c0_43 = arith.constant 0 : index
    %147 = vector.load %arg1[%c74, %c0_43] : memref<80x128xf32, #tpu.memory_space<vmem>>, vector<1x128xf32>
    %148 = vector.shape_cast %147 : vector<1x128xf32> to vector<1x128xf32>
    %149 = vector.broadcast %148 : vector<1x128xf32> to vector<8x128xf32>
    %150 = arith.mulf %4, %149 : vector<8x128xf32>
    %c272 = arith.constant 272 : index
    %c0_44 = arith.constant 0 : index
    %151 = vector.load %arg2[%c272, %c0_44] : memref<320x128xf32, #tpu.memory_space<vmem>>, vector<8x128xf32>
    tpu.vector_store %arg2[%c272, %c0_44], %150 {strides = array<i32>} : memref<320x128xf32, #tpu.memory_space<vmem>>, vector<8x128xf32>,
    %c43 = arith.constant 43 : index
    %c0_45 = arith.constant 0 : index
    %152 = vector.load %arg1[%c43, %c0_45] : memref<80x128xf32, #tpu.memory_space<vmem>>, vector<1x128xf32>
    %153 = vector.shape_cast %152 : vector<1x128xf32> to vector<1x128xf32>
    %154 = vector.broadcast %153 : vector<1x128xf32> to vector<8x128xf32>
    %c51 = arith.constant 51 : index
    %c0_46 = arith.constant 0 : index
    %155 = vector.load %arg1[%c51, %c0_46] : memref<80x128xf32, #tpu.memory_space<vmem>>, vector<1x128xf32>
    %156 = vector.shape_cast %155 : vector<1x128xf32> to vector<1x128xf32>
    %157 = vector.broadcast %156 : vector<1x128xf32> to vector<8x128xf32>
    %c59 = arith.constant 59 : index
    %c0_47 = arith.constant 0 : index
    %158 = vector.load %arg1[%c59, %c0_47] : memref<80x128xf32, #tpu.memory_space<vmem>>, vector<1x128xf32>
    %159 = vector.shape_cast %158 : vector<1x128xf32> to vector<1x128xf32>
    %160 = vector.broadcast %159 : vector<1x128xf32> to vector<8x128xf32>
    %c67 = arith.constant 67 : index
    %c0_48 = arith.constant 0 : index
    %161 = vector.load %arg1[%c67, %c0_48] : memref<80x128xf32, #tpu.memory_space<vmem>>, vector<1x128xf32>
    %162 = vector.shape_cast %161 : vector<1x128xf32> to vector<1x128xf32>
    %163 = vector.broadcast %162 : vector<1x128xf32> to vector<8x128xf32>
    %164 = arith.mulf %0, %154 : vector<8x128xf32>
    %165 = arith.mulf %1, %157 : vector<8x128xf32>
    %166 = arith.addf %164, %165 : vector<8x128xf32>
    %167 = arith.mulf %2, %160 : vector<8x128xf32>
    %168 = arith.addf %166, %167 : vector<8x128xf32>
    %169 = arith.mulf %3, %163 : vector<8x128xf32>
    %170 = arith.addf %168, %169 : vector<8x128xf32>
    %c96 = arith.constant 96 : index
    %c0_49 = arith.constant 0 : index
    %171 = vector.load %arg2[%c96, %c0_49] : memref<320x128xf32, #tpu.memory_space<vmem>>, vector<8x128xf32>
    tpu.vector_store %arg2[%c96, %c0_49], %170 {strides = array<i32>} : memref<320x128xf32, #tpu.memory_space<vmem>>, vector<8x128xf32>,
    %172 = arith.mulf %1, %154 : vector<8x128xf32>
    %173 = arith.mulf %3, %160 : vector<8x128xf32>
    %174 = arith.addf %172, %173 : vector<8x128xf32>
    %175 = arith.mulf %0, %157 : vector<8x128xf32>
    %176 = arith.subf %174, %175 : vector<8x128xf32>
    %177 = arith.mulf %2, %163 : vector<8x128xf32>
    %178 = arith.subf %176, %177 : vector<8x128xf32>
    %c104 = arith.constant 104 : index
    %c0_50 = arith.constant 0 : index
    %179 = vector.load %arg2[%c104, %c0_50] : memref<320x128xf32, #tpu.memory_space<vmem>>, vector<8x128xf32>
    tpu.vector_store %arg2[%c104, %c0_50], %178 {strides = array<i32>} : memref<320x128xf32, #tpu.memory_space<vmem>>, vector<8x128xf32>,
    %180 = arith.mulf %1, %163 : vector<8x128xf32>
    %181 = arith.mulf %2, %154 : vector<8x128xf32>
    %182 = arith.addf %180, %181 : vector<8x128xf32>
    %183 = arith.mulf %0, %160 : vector<8x128xf32>
    %184 = arith.subf %182, %183 : vector<8x128xf32>
    %185 = arith.mulf %3, %157 : vector<8x128xf32>
    %186 = arith.subf %184, %185 : vector<8x128xf32>
    %c112 = arith.constant 112 : index
    %c0_51 = arith.constant 0 : index
    %187 = vector.load %arg2[%c112, %c0_51] : memref<320x128xf32, #tpu.memory_space<vmem>>, vector<8x128xf32>
    tpu.vector_store %arg2[%c112, %c0_51], %186 {strides = array<i32>} : memref<320x128xf32, #tpu.memory_space<vmem>>, vector<8x128xf32>,
    %188 = arith.mulf %2, %157 : vector<8x128xf32>
    %189 = arith.mulf %3, %154 : vector<8x128xf32>
    %190 = arith.addf %188, %189 : vector<8x128xf32>
    %191 = arith.mulf %0, %163 : vector<8x128xf32>
    %192 = arith.subf %190, %191 : vector<8x128xf32>
    %193 = arith.mulf %1, %160 : vector<8x128xf32>
    %194 = arith.subf %192, %193 : vector<8x128xf32>
    %c120 = arith.constant 120 : index
    %c0_52 = arith.constant 0 : index
    %195 = vector.load %arg2[%c120, %c0_52] : memref<320x128xf32, #tpu.memory_space<vmem>>, vector<8x128xf32>
    tpu.vector_store %arg2[%c120, %c0_52], %194 {strides = array<i32>} : memref<320x128xf32, #tpu.memory_space<vmem>>, vector<8x128xf32>,
    %c75 = arith.constant 75 : index
    %c0_53 = arith.constant 0 : index
    %196 = vector.load %arg1[%c75, %c0_53] : memref<80x128xf32, #tpu.memory_space<vmem>>, vector<1x128xf32>
    %197 = vector.shape_cast %196 : vector<1x128xf32> to vector<1x128xf32>
    %198 = vector.broadcast %197 : vector<1x128xf32> to vector<8x128xf32>
    %199 = arith.mulf %4, %198 : vector<8x128xf32>
    %c280 = arith.constant 280 : index
    %c0_54 = arith.constant 0 : index
    %200 = vector.load %arg2[%c280, %c0_54] : memref<320x128xf32, #tpu.memory_space<vmem>>, vector<8x128xf32>
    tpu.vector_store %arg2[%c280, %c0_54], %199 {strides = array<i32>} : memref<320x128xf32, #tpu.memory_space<vmem>>, vector<8x128xf32>,
    %c44 = arith.constant 44 : index
    %c0_55 = arith.constant 0 : index
    %201 = vector.load %arg1[%c44, %c0_55] : memref<80x128xf32, #tpu.memory_space<vmem>>, vector<1x128xf32>
    %202 = vector.shape_cast %201 : vector<1x128xf32> to vector<1x128xf32>
    %203 = vector.broadcast %202 : vector<1x128xf32> to vector<8x128xf32>
    %c52 = arith.constant 52 : index
    %c0_56 = arith.constant 0 : index
    %204 = vector.load %arg1[%c52, %c0_56] : memref<80x128xf32, #tpu.memory_space<vmem>>, vector<1x128xf32>
    %205 = vector.shape_cast %204 : vector<1x128xf32> to vector<1x128xf32>
    %206 = vector.broadcast %205 : vector<1x128xf32> to vector<8x128xf32>
    %c60 = arith.constant 60 : index
    %c0_57 = arith.constant 0 : index
    %207 = vector.load %arg1[%c60, %c0_57] : memref<80x128xf32, #tpu.memory_space<vmem>>, vector<1x128xf32>
    %208 = vector.shape_cast %207 : vector<1x128xf32> to vector<1x128xf32>
    %209 = vector.broadcast %208 : vector<1x128xf32> to vector<8x128xf32>
    %c68 = arith.constant 68 : index
    %c0_58 = arith.constant 0 : index
    %210 = vector.load %arg1[%c68, %c0_58] : memref<80x128xf32, #tpu.memory_space<vmem>>, vector<1x128xf32>
    %211 = vector.shape_cast %210 : vector<1x128xf32> to vector<1x128xf32>
    %212 = vector.broadcast %211 : vector<1x128xf32> to vector<8x128xf32>
    %213 = arith.mulf %0, %203 : vector<8x128xf32>
    %214 = arith.mulf %1, %206 : vector<8x128xf32>
    %215 = arith.addf %213, %214 : vector<8x128xf32>
    %216 = arith.mulf %2, %209 : vector<8x128xf32>
    %217 = arith.addf %215, %216 : vector<8x128xf32>
    %218 = arith.mulf %3, %212 : vector<8x128xf32>
    %219 = arith.addf %217, %218 : vector<8x128xf32>
    %c128 = arith.constant 128 : index
    %c0_59 = arith.constant 0 : index
    %220 = vector.load %arg2[%c128, %c0_59] : memref<320x128xf32, #tpu.memory_space<vmem>>, vector<8x128xf32>
    tpu.vector_store %arg2[%c128, %c0_59], %219 {strides = array<i32>} : memref<320x128xf32, #tpu.memory_space<vmem>>, vector<8x128xf32>,
    %221 = arith.mulf %1, %203 : vector<8x128xf32>
    %222 = arith.mulf %3, %209 : vector<8x128xf32>
    %223 = arith.addf %221, %222 : vector<8x128xf32>
    %224 = arith.mulf %0, %206 : vector<8x128xf32>
    %225 = arith.subf %223, %224 : vector<8x128xf32>
    %226 = arith.mulf %2, %212 : vector<8x128xf32>
    %227 = arith.subf %225, %226 : vector<8x128xf32>
    %c136 = arith.constant 136 : index
    %c0_60 = arith.constant 0 : index
    %228 = vector.load %arg2[%c136, %c0_60] : memref<320x128xf32, #tpu.memory_space<vmem>>, vector<8x128xf32>
    tpu.vector_store %arg2[%c136, %c0_60], %227 {strides = array<i32>} : memref<320x128xf32, #tpu.memory_space<vmem>>, vector<8x128xf32>,
    %229 = arith.mulf %1, %212 : vector<8x128xf32>
    %230 = arith.mulf %2, %203 : vector<8x128xf32>
    %231 = arith.addf %229, %230 : vector<8x128xf32>
    %232 = arith.mulf %0, %209 : vector<8x128xf32>
    %233 = arith.subf %231, %232 : vector<8x128xf32>
    %234 = arith.mulf %3, %206 : vector<8x128xf32>
    %235 = arith.subf %233, %234 : vector<8x128xf32>
    %c144 = arith.constant 144 : index
    %c0_61 = arith.constant 0 : index
    %236 = vector.load %arg2[%c144, %c0_61] : memref<320x128xf32, #tpu.memory_space<vmem>>, vector<8x128xf32>
    tpu.vector_store %arg2[%c144, %c0_61], %235 {strides = array<i32>} : memref<320x128xf32, #tpu.memory_space<vmem>>, vector<8x128xf32>,
    %237 = arith.mulf %2, %206 : vector<8x128xf32>
    %238 = arith.mulf %3, %203 : vector<8x128xf32>
    %239 = arith.addf %237, %238 : vector<8x128xf32>
    %240 = arith.mulf %0, %212 : vector<8x128xf32>
    %241 = arith.subf %239, %240 : vector<8x128xf32>
    %242 = arith.mulf %1, %209 : vector<8x128xf32>
    %243 = arith.subf %241, %242 : vector<8x128xf32>
    %c152 = arith.constant 152 : index
    %c0_62 = arith.constant 0 : index
    %244 = vector.load %arg2[%c152, %c0_62] : memref<320x128xf32, #tpu.memory_space<vmem>>, vector<8x128xf32>
    tpu.vector_store %arg2[%c152, %c0_62], %243 {strides = array<i32>} : memref<320x128xf32, #tpu.memory_space<vmem>>, vector<8x128xf32>,
    %c76 = arith.constant 76 : index
    %c0_63 = arith.constant 0 : index
    %245 = vector.load %arg1[%c76, %c0_63] : memref<80x128xf32, #tpu.memory_space<vmem>>, vector<1x128xf32>
    %246 = vector.shape_cast %245 : vector<1x128xf32> to vector<1x128xf32>
    %247 = vector.broadcast %246 : vector<1x128xf32> to vector<8x128xf32>
    %248 = arith.mulf %4, %247 : vector<8x128xf32>
    %c288 = arith.constant 288 : index
    %c0_64 = arith.constant 0 : index
    %249 = vector.load %arg2[%c288, %c0_64] : memref<320x128xf32, #tpu.memory_space<vmem>>, vector<8x128xf32>
    tpu.vector_store %arg2[%c288, %c0_64], %248 {strides = array<i32>} : memref<320x128xf32, #tpu.memory_space<vmem>>, vector<8x128xf32>,
    %c45 = arith.constant 45 : index
    %c0_65 = arith.constant 0 : index
    %250 = vector.load %arg1[%c45, %c0_65] : memref<80x128xf32, #tpu.memory_space<vmem>>, vector<1x128xf32>
    %251 = vector.shape_cast %250 : vector<1x128xf32> to vector<1x128xf32>
    %252 = vector.broadcast %251 : vector<1x128xf32> to vector<8x128xf32>
    %c53 = arith.constant 53 : index
    %c0_66 = arith.constant 0 : index
    %253 = vector.load %arg1[%c53, %c0_66] : memref<80x128xf32, #tpu.memory_space<vmem>>, vector<1x128xf32>
    %254 = vector.shape_cast %253 : vector<1x128xf32> to vector<1x128xf32>
    %255 = vector.broadcast %254 : vector<1x128xf32> to vector<8x128xf32>
    %c61 = arith.constant 61 : index
    %c0_67 = arith.constant 0 : index
    %256 = vector.load %arg1[%c61, %c0_67] : memref<80x128xf32, #tpu.memory_space<vmem>>, vector<1x128xf32>
    %257 = vector.shape_cast %256 : vector<1x128xf32> to vector<1x128xf32>
    %258 = vector.broadcast %257 : vector<1x128xf32> to vector<8x128xf32>
    %c69 = arith.constant 69 : index
    %c0_68 = arith.constant 0 : index
    %259 = vector.load %arg1[%c69, %c0_68] : memref<80x128xf32, #tpu.memory_space<vmem>>, vector<1x128xf32>
    %260 = vector.shape_cast %259 : vector<1x128xf32> to vector<1x128xf32>
    %261 = vector.broadcast %260 : vector<1x128xf32> to vector<8x128xf32>
    %262 = arith.mulf %0, %252 : vector<8x128xf32>
    %263 = arith.mulf %1, %255 : vector<8x128xf32>
    %264 = arith.addf %262, %263 : vector<8x128xf32>
    %265 = arith.mulf %2, %258 : vector<8x128xf32>
    %266 = arith.addf %264, %265 : vector<8x128xf32>
    %267 = arith.mulf %3, %261 : vector<8x128xf32>
    %268 = arith.addf %266, %267 : vector<8x128xf32>
    %c160 = arith.constant 160 : index
    %c0_69 = arith.constant 0 : index
    %269 = vector.load %arg2[%c160, %c0_69] : memref<320x128xf32, #tpu.memory_space<vmem>>, vector<8x128xf32>
    tpu.vector_store %arg2[%c160, %c0_69], %268 {strides = array<i32>} : memref<320x128xf32, #tpu.memory_space<vmem>>, vector<8x128xf32>,
    %270 = arith.mulf %1, %252 : vector<8x128xf32>
    %271 = arith.mulf %3, %258 : vector<8x128xf32>
    %272 = arith.addf %270, %271 : vector<8x128xf32>
    %273 = arith.mulf %0, %255 : vector<8x128xf32>
    %274 = arith.subf %272, %273 : vector<8x128xf32>
    %275 = arith.mulf %2, %261 : vector<8x128xf32>
    %276 = arith.subf %274, %275 : vector<8x128xf32>
    %c168 = arith.constant 168 : index
    %c0_70 = arith.constant 0 : index
    %277 = vector.load %arg2[%c168, %c0_70] : memref<320x128xf32, #tpu.memory_space<vmem>>, vector<8x128xf32>
    tpu.vector_store %arg2[%c168, %c0_70], %276 {strides = array<i32>} : memref<320x128xf32, #tpu.memory_space<vmem>>, vector<8x128xf32>,
    %278 = arith.mulf %1, %261 : vector<8x128xf32>
    %279 = arith.mulf %2, %252 : vector<8x128xf32>
    %280 = arith.addf %278, %279 : vector<8x128xf32>
    %281 = arith.mulf %0, %258 : vector<8x128xf32>
    %282 = arith.subf %280, %281 : vector<8x128xf32>
    %283 = arith.mulf %3, %255 : vector<8x128xf32>
    %284 = arith.subf %282, %283 : vector<8x128xf32>
    %c176 = arith.constant 176 : index
    %c0_71 = arith.constant 0 : index
    %285 = vector.load %arg2[%c176, %c0_71] : memref<320x128xf32, #tpu.memory_space<vmem>>, vector<8x128xf32>
    tpu.vector_store %arg2[%c176, %c0_71], %284 {strides = array<i32>} : memref<320x128xf32, #tpu.memory_space<vmem>>, vector<8x128xf32>,
    %286 = arith.mulf %2, %255 : vector<8x128xf32>
    %287 = arith.mulf %3, %252 : vector<8x128xf32>
    %288 = arith.addf %286, %287 : vector<8x128xf32>
    %289 = arith.mulf %0, %261 : vector<8x128xf32>
    %290 = arith.subf %288, %289 : vector<8x128xf32>
    %291 = arith.mulf %1, %258 : vector<8x128xf32>
    %292 = arith.subf %290, %291 : vector<8x128xf32>
    %c184 = arith.constant 184 : index
    %c0_72 = arith.constant 0 : index
    %293 = vector.load %arg2[%c184, %c0_72] : memref<320x128xf32, #tpu.memory_space<vmem>>, vector<8x128xf32>
    tpu.vector_store %arg2[%c184, %c0_72], %292 {strides = array<i32>} : memref<320x128xf32, #tpu.memory_space<vmem>>, vector<8x128xf32>,
    %c77 = arith.constant 77 : index
    %c0_73 = arith.constant 0 : index
    %294 = vector.load %arg1[%c77, %c0_73] : memref<80x128xf32, #tpu.memory_space<vmem>>, vector<1x128xf32>
    %295 = vector.shape_cast %294 : vector<1x128xf32> to vector<1x128xf32>
    %296 = vector.broadcast %295 : vector<1x128xf32> to vector<8x128xf32>
    %297 = arith.mulf %4, %296 : vector<8x128xf32>
    %c296 = arith.constant 296 : index
    %c0_74 = arith.constant 0 : index
    %298 = vector.load %arg2[%c296, %c0_74] : memref<320x128xf32, #tpu.memory_space<vmem>>, vector<8x128xf32>
    tpu.vector_store %arg2[%c296, %c0_74], %297 {strides = array<i32>} : memref<320x128xf32, #tpu.memory_space<vmem>>, vector<8x128xf32>,
    %c46 = arith.constant 46 : index
    %c0_75 = arith.constant 0 : index
    %299 = vector.load %arg1[%c46, %c0_75] : memref<80x128xf32, #tpu.memory_space<vmem>>, vector<1x128xf32>
    %300 = vector.shape_cast %299 : vector<1x128xf32> to vector<1x128xf32>
    %301 = vector.broadcast %300 : vector<1x128xf32> to vector<8x128xf32>
    %c54 = arith.constant 54 : index
    %c0_76 = arith.constant 0 : index
    %302 = vector.load %arg1[%c54, %c0_76] : memref<80x128xf32, #tpu.memory_space<vmem>>, vector<1x128xf32>
    %303 = vector.shape_cast %302 : vector<1x128xf32> to vector<1x128xf32>
    %304 = vector.broadcast %303 : vector<1x128xf32> to vector<8x128xf32>
    %c62 = arith.constant 62 : index
    %c0_77 = arith.constant 0 : index
    %305 = vector.load %arg1[%c62, %c0_77] : memref<80x128xf32, #tpu.memory_space<vmem>>, vector<1x128xf32>
    %306 = vector.shape_cast %305 : vector<1x128xf32> to vector<1x128xf32>
    %307 = vector.broadcast %306 : vector<1x128xf32> to vector<8x128xf32>
    %c70 = arith.constant 70 : index
    %c0_78 = arith.constant 0 : index
    %308 = vector.load %arg1[%c70, %c0_78] : memref<80x128xf32, #tpu.memory_space<vmem>>, vector<1x128xf32>
    %309 = vector.shape_cast %308 : vector<1x128xf32> to vector<1x128xf32>
    %310 = vector.broadcast %309 : vector<1x128xf32> to vector<8x128xf32>
    %311 = arith.mulf %0, %301 : vector<8x128xf32>
    %312 = arith.mulf %1, %304 : vector<8x128xf32>
    %313 = arith.addf %311, %312 : vector<8x128xf32>
    %314 = arith.mulf %2, %307 : vector<8x128xf32>
    %315 = arith.addf %313, %314 : vector<8x128xf32>
    %316 = arith.mulf %3, %310 : vector<8x128xf32>
    %317 = arith.addf %315, %316 : vector<8x128xf32>
    %c192 = arith.constant 192 : index
    %c0_79 = arith.constant 0 : index
    %318 = vector.load %arg2[%c192, %c0_79] : memref<320x128xf32, #tpu.memory_space<vmem>>, vector<8x128xf32>
    tpu.vector_store %arg2[%c192, %c0_79], %317 {strides = array<i32>} : memref<320x128xf32, #tpu.memory_space<vmem>>, vector<8x128xf32>,
    %319 = arith.mulf %1, %301 : vector<8x128xf32>
    %320 = arith.mulf %3, %307 : vector<8x128xf32>
    %321 = arith.addf %319, %320 : vector<8x128xf32>
    %322 = arith.mulf %0, %304 : vector<8x128xf32>
    %323 = arith.subf %321, %322 : vector<8x128xf32>
    %324 = arith.mulf %2, %310 : vector<8x128xf32>
    %325 = arith.subf %323, %324 : vector<8x128xf32>
    %c200 = arith.constant 200 : index
    %c0_80 = arith.constant 0 : index
    %326 = vector.load %arg2[%c200, %c0_80] : memref<320x128xf32, #tpu.memory_space<vmem>>, vector<8x128xf32>
    tpu.vector_store %arg2[%c200, %c0_80], %325 {strides = array<i32>} : memref<320x128xf32, #tpu.memory_space<vmem>>, vector<8x128xf32>,
    %327 = arith.mulf %1, %310 : vector<8x128xf32>
    %328 = arith.mulf %2, %301 : vector<8x128xf32>
    %329 = arith.addf %327, %328 : vector<8x128xf32>
    %330 = arith.mulf %0, %307 : vector<8x128xf32>
    %331 = arith.subf %329, %330 : vector<8x128xf32>
    %332 = arith.mulf %3, %304 : vector<8x128xf32>
    %333 = arith.subf %331, %332 : vector<8x128xf32>
    %c208 = arith.constant 208 : index
    %c0_81 = arith.constant 0 : index
    %334 = vector.load %arg2[%c208, %c0_81] : memref<320x128xf32, #tpu.memory_space<vmem>>, vector<8x128xf32>
    tpu.vector_store %arg2[%c208, %c0_81], %333 {strides = array<i32>} : memref<320x128xf32, #tpu.memory_space<vmem>>, vector<8x128xf32>,
    %335 = arith.mulf %2, %304 : vector<8x128xf32>
    %336 = arith.mulf %3, %301 : vector<8x128xf32>
    %337 = arith.addf %335, %336 : vector<8x128xf32>
    %338 = arith.mulf %0, %310 : vector<8x128xf32>
    %339 = arith.subf %337, %338 : vector<8x128xf32>
    %340 = arith.mulf %1, %307 : vector<8x128xf32>
    %341 = arith.subf %339, %340 : vector<8x128xf32>
    %c216 = arith.constant 216 : index
    %c0_82 = arith.constant 0 : index
    %342 = vector.load %arg2[%c216, %c0_82] : memref<320x128xf32, #tpu.memory_space<vmem>>, vector<8x128xf32>
    tpu.vector_store %arg2[%c216, %c0_82], %341 {strides = array<i32>} : memref<320x128xf32, #tpu.memory_space<vmem>>, vector<8x128xf32>,
    %c78 = arith.constant 78 : index
    %c0_83 = arith.constant 0 : index
    %343 = vector.load %arg1[%c78, %c0_83] : memref<80x128xf32, #tpu.memory_space<vmem>>, vector<1x128xf32>
    %344 = vector.shape_cast %343 : vector<1x128xf32> to vector<1x128xf32>
    %345 = vector.broadcast %344 : vector<1x128xf32> to vector<8x128xf32>
    %346 = arith.mulf %4, %345 : vector<8x128xf32>
    %c304 = arith.constant 304 : index
    %c0_84 = arith.constant 0 : index
    %347 = vector.load %arg2[%c304, %c0_84] : memref<320x128xf32, #tpu.memory_space<vmem>>, vector<8x128xf32>
    tpu.vector_store %arg2[%c304, %c0_84], %346 {strides = array<i32>} : memref<320x128xf32, #tpu.memory_space<vmem>>, vector<8x128xf32>,
    %c47 = arith.constant 47 : index
    %c0_85 = arith.constant 0 : index
    %348 = vector.load %arg1[%c47, %c0_85] : memref<80x128xf32, #tpu.memory_space<vmem>>, vector<1x128xf32>
    %349 = vector.shape_cast %348 : vector<1x128xf32> to vector<1x128xf32>
    %350 = vector.broadcast %349 : vector<1x128xf32> to vector<8x128xf32>
    %c55 = arith.constant 55 : index
    %c0_86 = arith.constant 0 : index
    %351 = vector.load %arg1[%c55, %c0_86] : memref<80x128xf32, #tpu.memory_space<vmem>>, vector<1x128xf32>
    %352 = vector.shape_cast %351 : vector<1x128xf32> to vector<1x128xf32>
    %353 = vector.broadcast %352 : vector<1x128xf32> to vector<8x128xf32>
    %c63 = arith.constant 63 : index
    %c0_87 = arith.constant 0 : index
    %354 = vector.load %arg1[%c63, %c0_87] : memref<80x128xf32, #tpu.memory_space<vmem>>, vector<1x128xf32>
    %355 = vector.shape_cast %354 : vector<1x128xf32> to vector<1x128xf32>
    %356 = vector.broadcast %355 : vector<1x128xf32> to vector<8x128xf32>
    %c71 = arith.constant 71 : index
    %c0_88 = arith.constant 0 : index
    %357 = vector.load %arg1[%c71, %c0_88] : memref<80x128xf32, #tpu.memory_space<vmem>>, vector<1x128xf32>
    %358 = vector.shape_cast %357 : vector<1x128xf32> to vector<1x128xf32>
    %359 = vector.broadcast %358 : vector<1x128xf32> to vector<8x128xf32>
    %360 = arith.mulf %0, %350 : vector<8x128xf32>
    %361 = arith.mulf %1, %353 : vector<8x128xf32>
    %362 = arith.addf %360, %361 : vector<8x128xf32>
    %363 = arith.mulf %2, %356 : vector<8x128xf32>
    %364 = arith.addf %362, %363 : vector<8x128xf32>
    %365 = arith.mulf %3, %359 : vector<8x128xf32>
    %366 = arith.addf %364, %365 : vector<8x128xf32>
    %c224 = arith.constant 224 : index
    %c0_89 = arith.constant 0 : index
    %367 = vector.load %arg2[%c224, %c0_89] : memref<320x128xf32, #tpu.memory_space<vmem>>, vector<8x128xf32>
    tpu.vector_store %arg2[%c224, %c0_89], %366 {strides = array<i32>} : memref<320x128xf32, #tpu.memory_space<vmem>>, vector<8x128xf32>,
    %368 = arith.mulf %1, %350 : vector<8x128xf32>
    %369 = arith.mulf %3, %356 : vector<8x128xf32>
    %370 = arith.addf %368, %369 : vector<8x128xf32>
    %371 = arith.mulf %0, %353 : vector<8x128xf32>
    %372 = arith.subf %370, %371 : vector<8x128xf32>
    %373 = arith.mulf %2, %359 : vector<8x128xf32>
    %374 = arith.subf %372, %373 : vector<8x128xf32>
    %c232 = arith.constant 232 : index
    %c0_90 = arith.constant 0 : index
    %375 = vector.load %arg2[%c232, %c0_90] : memref<320x128xf32, #tpu.memory_space<vmem>>, vector<8x128xf32>
    tpu.vector_store %arg2[%c232, %c0_90], %374 {strides = array<i32>} : memref<320x128xf32, #tpu.memory_space<vmem>>, vector<8x128xf32>,
    %376 = arith.mulf %1, %359 : vector<8x128xf32>
    %377 = arith.mulf %2, %350 : vector<8x128xf32>
    %378 = arith.addf %376, %377 : vector<8x128xf32>
    %379 = arith.mulf %0, %356 : vector<8x128xf32>
    %380 = arith.subf %378, %379 : vector<8x128xf32>
    %381 = arith.mulf %3, %353 : vector<8x128xf32>
    %382 = arith.subf %380, %381 : vector<8x128xf32>
    %c240 = arith.constant 240 : index
    %c0_91 = arith.constant 0 : index
    %383 = vector.load %arg2[%c240, %c0_91] : memref<320x128xf32, #tpu.memory_space<vmem>>, vector<8x128xf32>
    tpu.vector_store %arg2[%c240, %c0_91], %382 {strides = array<i32>} : memref<320x128xf32, #tpu.memory_space<vmem>>, vector<8x128xf32>,
    %384 = arith.mulf %2, %353 : vector<8x128xf32>
    %385 = arith.mulf %3, %350 : vector<8x128xf32>
    %386 = arith.addf %384, %385 : vector<8x128xf32>
    %387 = arith.mulf %0, %359 : vector<8x128xf32>
    %388 = arith.subf %386, %387 : vector<8x128xf32>
    %389 = arith.mulf %1, %356 : vector<8x128xf32>
    %390 = arith.subf %388, %389 : vector<8x128xf32>
    %c248 = arith.constant 248 : index
    %c0_92 = arith.constant 0 : index
    %391 = vector.load %arg2[%c248, %c0_92] : memref<320x128xf32, #tpu.memory_space<vmem>>, vector<8x128xf32>
    tpu.vector_store %arg2[%c248, %c0_92], %390 {strides = array<i32>} : memref<320x128xf32, #tpu.memory_space<vmem>>, vector<8x128xf32>,
    %c79 = arith.constant 79 : index
    %c0_93 = arith.constant 0 : index
    %392 = vector.load %arg1[%c79, %c0_93] : memref<80x128xf32, #tpu.memory_space<vmem>>, vector<1x128xf32>
    %393 = vector.shape_cast %392 : vector<1x128xf32> to vector<1x128xf32>
    %394 = vector.broadcast %393 : vector<1x128xf32> to vector<8x128xf32>
    %395 = arith.mulf %4, %394 : vector<8x128xf32>
    %c312 = arith.constant 312 : index
    %c0_94 = arith.constant 0 : index
    %396 = vector.load %arg2[%c312, %c0_94] : memref<320x128xf32, #tpu.memory_space<vmem>>, vector<8x128xf32>
    tpu.vector_store %arg2[%c312, %c0_94], %395 {strides = array<i32>} : memref<320x128xf32, #tpu.memory_space<vmem>>, vector<8x128xf32>,
    return
  }
  func.func @transform_0(%arg0: i32) -> (i32, i32) {
    %c0_i32 = arith.constant 0 : i32
    %c0_i32_0 = arith.constant 0 : i32
    return %c0_i32, %arg0 : i32, i32
  }
  func.func @transform_1(%arg0: i32) -> (i32, i32) {
    %c0_i32 = arith.constant 0 : i32
    %c0_i32_0 = arith.constant 0 : i32
    return %c0_i32, %arg0 : i32, i32
  }
}

</mosaic_0001>

<llo_original>
// kernel: quaternion_relative_measure_map_weights_product_prior.1
$region0: #{quaternion_relative_measure_map_weights_product_prior.1}
  #allocation0 [shape = 'u32[]', space=smem, size = 0x4, offset = 0x4, fixed_abs, tag = 'smem constant byte address 0x4 - core index']
  #allocation1 [shape = 'u32[144,128]{1,0:T(1,128)}', space=vmem, size = 0x12000, scoped, tag = 'internal scratch']
  %s0 = inlined_call_operand.vmem [shape: f32[80,128], index: 0, kind: input, shape index: {}]
  %s1 = inlined_call_operand.vmem [shape: f32[320,128], index: 1, kind: output, shape index: {}]
  %s2 = sld [smem:[#allocation0]]
  $region14: #{quaternion_relative_measure_map_weights_product_prior.1} parent=0
    _
  %s4 = ssub.s32 1, %s2
  %s5 = scalar_select 0, %s4, %s2
  // Predicated region
  $region2: #{quaternion_relative_measure_map_weights_product_prior.1} parent=0 // pred_check
    _
  $region3: #{quaternion_relative_measure_map_weights_product_prior.1} parent=0 // pred_check_branch
    %7 = sbr.rel (0) target = $region5
  $region4: #{quaternion_relative_measure_map_weights_product_prior.1} parent=0 // pred_region
    _
  $region5: #{quaternion_relative_measure_map_weights_product_prior.1} parent=0 // pred_fallthru
    _
  %v8 = vld [vmem:[%s0] sm:$0xff]
  %v9 = vld [vmem:[%s0 + $0x8] sm:$0xff]
  %v10 = vld [vmem:[%s0 + $0x10] sm:$0xff]
  %v11 = vld [vmem:[%s0 + $0x18] sm:$0xff]
  %v12 = vld [vmem:[%s0 + $0x20] sm:$0xff]
  %v13 = vld [vmem:[%s0 + $0x28] sm:$0x1]
  %v14 = vlaneseq
  %v15 = vshrl.u32 %v14, 7
  %v16 = vsub.s32 0, %v15
  %v17 = vrot.slane %v13, %v16
  %v18 = vld [vmem:[%s0 + $0x30] sm:$0x1]
  %v19 = vlaneseq
  %v20 = vshrl.u32 %v19, 7
  %v21 = vsub.s32 0, %v20
  %v22 = vrot.slane %v18, %v21
  %v23 = vld [vmem:[%s0 + $0x38] sm:$0x1]
  %v24 = vlaneseq
  %v25 = vshrl.u32 %v24, 7
  %v26 = vsub.s32 0, %v25
  %v27 = vrot.slane %v23, %v26
  %v28 = vld [vmem:[%s0 + $0x40] sm:$0x1]
  %v29 = vlaneseq
  %v30 = vshrl.u32 %v29, 7
  %v31 = vsub.s32 0, %v30
  %v32 = vrot.slane %v28, %v31
  %v33 = vmul.f32 %v8, %v17
  %v34 = vmul.f32 %v9, %v22
  %v35 = vadd.f32 %v33, %v34
  %v36 = vmul.f32 %v10, %v27
  %v37 = vadd.f32 %v35, %v36
  %v38 = vmul.f32 %v11, %v32
  %v39 = vadd.f32 %v37, %v38
  %40 = vst [vmem:[%s1] sm:$0xff] %v39
  %v41 = vmul.f32 %v9, %v17
  %v42 = vmul.f32 %v11, %v27
  %v43 = vadd.f32 %v41, %v42
  %v44 = vmul.f32 %v8, %v22
  %v45 = vsub.f32 %v43, %v44
  %v46 = vmul.f32 %v10, %v32
  %v47 = vsub.f32 %v45, %v46
  %48 = vst [vmem:[%s1 + $0x8] sm:$0xff] %v47
  %v49 = vmul.f32 %v9, %v32
  %v50 = vmul.f32 %v10, %v17
  %v51 = vadd.f32 %v49, %v50
  %v52 = vmul.f32 %v8, %v27
  %v53 = vsub.f32 %v51, %v52
  %v54 = vmul.f32 %v11, %v22
  %v55 = vsub.f32 %v53, %v54
  %56 = vst [vmem:[%s1 + $0x10] sm:$0xff] %v55
  %v57 = vmul.f32 %v10, %v22
  %v58 = vmul.f32 %v11, %v17
  %v59 = vadd.f32 %v57, %v58
  %v60 = vmul.f32 %v8, %v32
  %v61 = vsub.f32 %v59, %v60
  %v62 = vmul.f32 %v9, %v27
  %v63 = vsub.f32 %v61, %v62
  %64 = vst [vmem:[%s1 + $0x18] sm:$0xff] %v63
  %v65 = vld [vmem:[%s0 + $0x48] sm:$0x1]
  %v66 = vlaneseq
  %v67 = vshrl.u32 %v66, 7
  %v68 = vsub.s32 0, %v67
  %v69 = vrot.slane %v65, %v68
  %v70 = vmul.f32 %v12, %v69
  %71 = vst [vmem:[%s1 + $0x100] sm:$0xff] %v70
  %v72 = vld [vmem:[%s0 + $0x29] sm:$0x1]
  %v73 = vlaneseq
  %v74 = vshrl.u32 %v73, 7
  %v75 = vsub.s32 0, %v74
  %v76 = vrot.slane %v72, %v75
  %v77 = vld [vmem:[%s0 + $0x31] sm:$0x1]
  %v78 = vlaneseq
  %v79 = vshrl.u32 %v78, 7
  %v80 = vsub.s32 0, %v79
  %v81 = vrot.slane %v77, %v80
  %v82 = vld [vmem:[%s0 + $0x39] sm:$0x1]
  %v83 = vlaneseq
  %v84 = vshrl.u32 %v83, 7
  %v85 = vsub.s32 0, %v84
  %v86 = vrot.slane %v82, %v85
  %v87 = vld [vmem:[%s0 + $0x41] sm:$0x1]
  %v88 = vlaneseq
  %v89 = vshrl.u32 %v88, 7
  %v90 = vsub.s32 0, %v89
  %v91 = vrot.slane %v87, %v90
  %v92 = vmul.f32 %v8, %v76
  %v93 = vmul.f32 %v9, %v81
  %v94 = vadd.f32 %v92, %v93
  %v95 = vmul.f32 %v10, %v86
  %v96 = vadd.f32 %v94, %v95
  %v97 = vmul.f32 %v11, %v91
  %v98 = vadd.f32 %v96, %v97
  %99 = vst [vmem:[%s1 + $0x20] sm:$0xff] %v98
  %v100 = vmul.f32 %v9, %v76
  %v101 = vmul.f32 %v11, %v86
  %v102 = vadd.f32 %v100, %v101
  %v103 = vmul.f32 %v8, %v81
  %v104 = vsub.f32 %v102, %v103
  %v105 = vmul.f32 %v10, %v91
  %v106 = vsub.f32 %v104, %v105
  %107 = vst [vmem:[%s1 + $0x28] sm:$0xff] %v106
  %v108 = vmul.f32 %v9, %v91
  %v109 = vmul.f32 %v10, %v76
  %v110 = vadd.f32 %v108, %v109
  %v111 = vmul.f32 %v8, %v86
  %v112 = vsub.f32 %v110, %v111
  %v113 = vmul.f32 %v11, %v81
  %v114 = vsub.f32 %v112, %v113
  %115 = vst [vmem:[%s1 + $0x30] sm:$0xff] %v114
  %v116 = vmul.f32 %v10, %v81
  %v117 = vmul.f32 %v11, %v76
  %v118 = vadd.f32 %v116, %v117
  %v119 = vmul.f32 %v8, %v91
  %v120 = vsub.f32 %v118, %v119
  %v121 = vmul.f32 %v9, %v86
  %v122 = vsub.f32 %v120, %v121
  %123 = vst [vmem:[%s1 + $0x38] sm:$0xff] %v122
  %v124 = vld [vmem:[%s0 + $0x49] sm:$0x1]
  %v125 = vlaneseq
  %v126 = vshrl.u32 %v125, 7
  %v127 = vsub.s32 0, %v126
  %v128 = vrot.slane %v124, %v127
  %v129 = vmul.f32 %v12, %v128
  %130 = vst [vmem:[%s1 + $0x108] sm:$0xff] %v129
  %v131 = vld [vmem:[%s0 + $0x2a] sm:$0x1]
  %v132 = vlaneseq
  %v133 = vshrl.u32 %v132, 7
  %v134 = vsub.s32 0, %v133
  %v135 = vrot.slane %v131, %v134
  %v136 = vld [vmem:[%s0 + $0x32] sm:$0x1]
  %v137 = vlaneseq
  %v138 = vshrl.u32 %v137, 7
  %v139 = vsub.s32 0, %v138
  %v140 = vrot.slane %v136, %v139
  %v141 = vld [vmem:[%s0 + $0x3a] sm:$0x1]
  %v142 = vlaneseq
  %v143 = vshrl.u32 %v142, 7
  %v144 = vsub.s32 0, %v143
  %v145 = vrot.slane %v141, %v144
  %v146 = vld [vmem:[%s0 + $0x42] sm:$0x1]
  %v147 = vlaneseq
  %v148 = vshrl.u32 %v147, 7
  %v149 = vsub.s32 0, %v148
  %v150 = vrot.slane %v146, %v149
  %v151 = vmul.f32 %v8, %v135
  %v152 = vmul.f32 %v9, %v140
  %v153 = vadd.f32 %v151, %v152
  %v154 = vmul.f32 %v10, %v145
  %v155 = vadd.f32 %v153, %v154
  %v156 = vmul.f32 %v11, %v150
  %v157 = vadd.f32 %v155, %v156
  %158 = vst [vmem:[%s1 + $0x40] sm:$0xff] %v157
  %v159 = vmul.f32 %v9, %v135
  %v160 = vmul.f32 %v11, %v145
  %v161 = vadd.f32 %v159, %v160
  %v162 = vmul.f32 %v8, %v140
  %v163 = vsub.f32 %v161, %v162
  %v164 = vmul.f32 %v10, %v150
  %v165 = vsub.f32 %v163, %v164
  %166 = vst [vmem:[%s1 + $0x48] sm:$0xff] %v165
  %v167 = vmul.f32 %v9, %v150
  %v168 = vmul.f32 %v10, %v135
  %v169 = vadd.f32 %v167, %v168
  %v170 = vmul.f32 %v8, %v145
  %v171 = vsub.f32 %v169, %v170
  %v172 = vmul.f32 %v11, %v140
  %v173 = vsub.f32 %v171, %v172
  %174 = vst [vmem:[%s1 + $0x50] sm:$0xff] %v173
  %v175 = vmul.f32 %v10, %v140
  %v176 = vmul.f32 %v11, %v135
  %v177 = vadd.f32 %v175, %v176
  %v178 = vmul.f32 %v8, %v150
  %v179 = vsub.f32 %v177, %v178
  %v180 = vmul.f32 %v9, %v145
  %v181 = vsub.f32 %v179, %v180
  %182 = vst [vmem:[%s1 + $0x58] sm:$0xff] %v181
  %v183 = vld [vmem:[%s0 + $0x4a] sm:$0x1]
  %v184 = vlaneseq
  %v185 = vshrl.u32 %v184, 7
  %v186 = vsub.s32 0, %v185
  %v187 = vrot.slane %v183, %v186
  %v188 = vmul.f32 %v12, %v187
  %189 = vst [vmem:[%s1 + $0x110] sm:$0xff] %v188
  %v190 = vld [vmem:[%s0 + $0x2b] sm:$0x1]
  %v191 = vlaneseq
  %v192 = vshrl.u32 %v191, 7
  %v193 = vsub.s32 0, %v192
  %v194 = vrot.slane %v190, %v193
  %v195 = vld [vmem:[%s0 + $0x33] sm:$0x1]
  %v196 = vlaneseq
  %v197 = vshrl.u32 %v196, 7
  %v198 = vsub.s32 0, %v197
  %v199 = vrot.slane %v195, %v198
  %v200 = vld [vmem:[%s0 + $0x3b] sm:$0x1]
  %v201 = vlaneseq
  %v202 = vshrl.u32 %v201, 7
  %v203 = vsub.s32 0, %v202
  %v204 = vrot.slane %v200, %v203
  %v205 = vld [vmem:[%s0 + $0x43] sm:$0x1]
  %v206 = vlaneseq
  %v207 = vshrl.u32 %v206, 7
  %v208 = vsub.s32 0, %v207
  %v209 = vrot.slane %v205, %v208
  %v210 = vmul.f32 %v8, %v194
  %v211 = vmul.f32 %v9, %v199
  %v212 = vadd.f32 %v210, %v211
  %v213 = vmul.f32 %v10, %v204
  %v214 = vadd.f32 %v212, %v213
  %v215 = vmul.f32 %v11, %v209
  %v216 = vadd.f32 %v214, %v215
  %217 = vst [vmem:[%s1 + $0x60] sm:$0xff] %v216
  %v218 = vmul.f32 %v9, %v194
  %v219 = vmul.f32 %v11, %v204
  %v220 = vadd.f32 %v218, %v219
  %v221 = vmul.f32 %v8, %v199
  %v222 = vsub.f32 %v220, %v221
  %v223 = vmul.f32 %v10, %v209
  %v224 = vsub.f32 %v222, %v223
  %225 = vst [vmem:[%s1 + $0x68] sm:$0xff] %v224
  %v226 = vmul.f32 %v9, %v209
  %v227 = vmul.f32 %v10, %v194
  %v228 = vadd.f32 %v226, %v227
  %v229 = vmul.f32 %v8, %v204
  %v230 = vsub.f32 %v228, %v229
  %v231 = vmul.f32 %v11, %v199
  %v232 = vsub.f32 %v230, %v231
  %233 = vst [vmem:[%s1 + $0x70] sm:$0xff] %v232
  %v234 = vmul.f32 %v10, %v199
  %v235 = vmul.f32 %v11, %v194
  %v236 = vadd.f32 %v234, %v235
  %v237 = vmul.f32 %v8, %v209
  %v238 = vsub.f32 %v236, %v237
  %v239 = vmul.f32 %v9, %v204
  %v240 = vsub.f32 %v238, %v239
  %241 = vst [vmem:[%s1 + $0x78] sm:$0xff] %v240
  %v242 = vld [vmem:[%s0 + $0x4b] sm:$0x1]
  %v243 = vlaneseq
  %v244 = vshrl.u32 %v243, 7
  %v245 = vsub.s32 0, %v244
  %v246 = vrot.slane %v242, %v245
  %v247 = vmul.f32 %v12, %v246
  %248 = vst [vmem:[%s1 + $0x118] sm:$0xff] %v247
  %v249 = vld [vmem:[%s0 + $0x2c] sm:$0x1]
  %v250 = vlaneseq
  %v251 = vshrl.u32 %v250, 7
  %v252 = vsub.s32 0, %v251
  %v253 = vrot.slane %v249, %v252
  %v254 = vld [vmem:[%s0 + $0x34] sm:$0x1]
  %v255 = vlaneseq
  %v256 = vshrl.u32 %v255, 7
  %v257 = vsub.s32 0, %v256
  %v258 = vrot.slane %v254, %v257
  %v259 = vld [vmem:[%s0 + $0x3c] sm:$0x1]
  %v260 = vlaneseq
  %v261 = vshrl.u32 %v260, 7
  %v262 = vsub.s32 0, %v261
  %v263 = vrot.slane %v259, %v262
  %v264 = vld [vmem:[%s0 + $0x44] sm:$0x1]
  %v265 = vlaneseq
  %v266 = vshrl.u32 %v265, 7
  %v267 = vsub.s32 0, %v266
  %v268 = vrot.slane %v264, %v267
  %v269 = vmul.f32 %v8, %v253
  %v270 = vmul.f32 %v9, %v258
  %v271 = vadd.f32 %v269, %v270
  %v272 = vmul.f32 %v10, %v263
  %v273 = vadd.f32 %v271, %v272
  %v274 = vmul.f32 %v11, %v268
  %v275 = vadd.f32 %v273, %v274
  %276 = vst [vmem:[%s1 + $0x80] sm:$0xff] %v275
  %v277 = vmul.f32 %v9, %v253
  %v278 = vmul.f32 %v11, %v263
  %v279 = vadd.f32 %v277, %v278
  %v280 = vmul.f32 %v8, %v258
  %v281 = vsub.f32 %v279, %v280
  %v282 = vmul.f32 %v10, %v268
  %v283 = vsub.f32 %v281, %v282
  %284 = vst [vmem:[%s1 + $0x88] sm:$0xff] %v283
  %v285 = vmul.f32 %v9, %v268
  %v286 = vmul.f32 %v10, %v253
  %v287 = vadd.f32 %v285, %v286
  %v288 = vmul.f32 %v8, %v263
  %v289 = vsub.f32 %v287, %v288
  %v290 = vmul.f32 %v11, %v258
  %v291 = vsub.f32 %v289, %v290
  %292 = vst [vmem:[%s1 + $0x90] sm:$0xff] %v291
  %v293 = vmul.f32 %v10, %v258
  %v294 = vmul.f32 %v11, %v253
  %v295 = vadd.f32 %v293, %v294
  %v296 = vmul.f32 %v8, %v268
  %v297 = vsub.f32 %v295, %v296
  %v298 = vmul.f32 %v9, %v263
  %v299 = vsub.f32 %v297, %v298
  %300 = vst [vmem:[%s1 + $0x98] sm:$0xff] %v299
  %v301 = vld [vmem:[%s0 + $0x4c] sm:$0x1]
  %v302 = vlaneseq
  %v303 = vshrl.u32 %v302, 7
  %v304 = vsub.s32 0, %v303
  %v305 = vrot.slane %v301, %v304
  %v306 = vmul.f32 %v12, %v305
  %307 = vst [vmem:[%s1 + $0x120] sm:$0xff] %v306
  %v308 = vld [vmem:[%s0 + $0x2d] sm:$0x1]
  %v309 = vlaneseq
  %v310 = vshrl.u32 %v309, 7
  %v311 = vsub.s32 0, %v310
  %v312 = vrot.slane %v308, %v311
  %v313 = vld [vmem:[%s0 + $0x35] sm:$0x1]
  %v314 = vlaneseq
  %v315 = vshrl.u32 %v314, 7
  %v316 = vsub.s32 0, %v315
  %v317 = vrot.slane %v313, %v316
  %v318 = vld [vmem:[%s0 + $0x3d] sm:$0x1]
  %v319 = vlaneseq
  %v320 = vshrl.u32 %v319, 7
  %v321 = vsub.s32 0, %v320
  %v322 = vrot.slane %v318, %v321
  %v323 = vld [vmem:[%s0 + $0x45] sm:$0x1]
  %v324 = vlaneseq
  %v325 = vshrl.u32 %v324, 7
  %v326 = vsub.s32 0, %v325
  %v327 = vrot.slane %v323, %v326
  %v328 = vmul.f32 %v8, %v312
  %v329 = vmul.f32 %v9, %v317
  %v330 = vadd.f32 %v328, %v329
  %v331 = vmul.f32 %v10, %v322
  %v332 = vadd.f32 %v330, %v331
  %v333 = vmul.f32 %v11, %v327
  %v334 = vadd.f32 %v332, %v333
  %335 = vst [vmem:[%s1 + $0xa0] sm:$0xff] %v334
  %v336 = vmul.f32 %v9, %v312
  %v337 = vmul.f32 %v11, %v322
  %v338 = vadd.f32 %v336, %v337
  %v339 = vmul.f32 %v8, %v317
  %v340 = vsub.f32 %v338, %v339
  %v341 = vmul.f32 %v10, %v327
  %v342 = vsub.f32 %v340, %v341
  %343 = vst [vmem:[%s1 + $0xa8] sm:$0xff] %v342
  %v344 = vmul.f32 %v9, %v327
  %v345 = vmul.f32 %v10, %v312
  %v346 = vadd.f32 %v344, %v345
  %v347 = vmul.f32 %v8, %v322
  %v348 = vsub.f32 %v346, %v347
  %v349 = vmul.f32 %v11, %v317
  %v350 = vsub.f32 %v348, %v349
  %351 = vst [vmem:[%s1 + $0xb0] sm:$0xff] %v350
  %v352 = vmul.f32 %v10, %v317
  %v353 = vmul.f32 %v11, %v312
  %v354 = vadd.f32 %v352, %v353
  %v355 = vmul.f32 %v8, %v327
  %v356 = vsub.f32 %v354, %v355
  %v357 = vmul.f32 %v9, %v322
  %v358 = vsub.f32 %v356, %v357
  %359 = vst [vmem:[%s1 + $0xb8] sm:$0xff] %v358
  %v360 = vld [vmem:[%s0 + $0x4d] sm:$0x1]
  %v361 = vlaneseq
  %v362 = vshrl.u32 %v361, 7
  %v363 = vsub.s32 0, %v362
  %v364 = vrot.slane %v360, %v363
  %v365 = vmul.f32 %v12, %v364
  %366 = vst [vmem:[%s1 + $0x128] sm:$0xff] %v365
  %v367 = vld [vmem:[%s0 + $0x2e] sm:$0x1]
  %v368 = vlaneseq
  %v369 = vshrl.u32 %v368, 7
  %v370 = vsub.s32 0, %v369
  %v371 = vrot.slane %v367, %v370
  %v372 = vld [vmem:[%s0 + $0x36] sm:$0x1]
  %v373 = vlaneseq
  %v374 = vshrl.u32 %v373, 7
  %v375 = vsub.s32 0, %v374
  %v376 = vrot.slane %v372, %v375
  %v377 = vld [vmem:[%s0 + $0x3e] sm:$0x1]
  %v378 = vlaneseq
  %v379 = vshrl.u32 %v378, 7
  %v380 = vsub.s32 0, %v379
  %v381 = vrot.slane %v377, %v380
  %v382 = vld [vmem:[%s0 + $0x46] sm:$0x1]
  %v383 = vlaneseq
  %v384 = vshrl.u32 %v383, 7
  %v385 = vsub.s32 0, %v384
  %v386 = vrot.slane %v382, %v385
  %v387 = vmul.f32 %v8, %v371
  %v388 = vmul.f32 %v9, %v376
  %v389 = vadd.f32 %v387, %v388
  %v390 = vmul.f32 %v10, %v381
  %v391 = vadd.f32 %v389, %v390
  %v392 = vmul.f32 %v11, %v386
  %v393 = vadd.f32 %v391, %v392
  %394 = vst [vmem:[%s1 + $0xc0] sm:$0xff] %v393
  %v395 = vmul.f32 %v9, %v371
  %v396 = vmul.f32 %v11, %v381
  %v397 = vadd.f32 %v395, %v396
  %v398 = vmul.f32 %v8, %v376
  %v399 = vsub.f32 %v397, %v398
  %v400 = vmul.f32 %v10, %v386
  %v401 = vsub.f32 %v399, %v400
  %402 = vst [vmem:[%s1 + $0xc8] sm:$0xff] %v401
  %v403 = vmul.f32 %v9, %v386
  %v404 = vmul.f32 %v10, %v371
  %v405 = vadd.f32 %v403, %v404
  %v406 = vmul.f32 %v8, %v381
  %v407 = vsub.f32 %v405, %v406
  %v408 = vmul.f32 %v11, %v376
  %v409 = vsub.f32 %v407, %v408
  %410 = vst [vmem:[%s1 + $0xd0] sm:$0xff] %v409
  %v411 = vmul.f32 %v10, %v376
  %v412 = vmul.f32 %v11, %v371
  %v413 = vadd.f32 %v411, %v412
  %v414 = vmul.f32 %v8, %v386
  %v415 = vsub.f32 %v413, %v414
  %v416 = vmul.f32 %v9, %v381
  %v417 = vsub.f32 %v415, %v416
  %418 = vst [vmem:[%s1 + $0xd8] sm:$0xff] %v417
  %v419 = vld [vmem:[%s0 + $0x4e] sm:$0x1]
  %v420 = vlaneseq
  %v421 = vshrl.u32 %v420, 7
  %v422 = vsub.s32 0, %v421
  %v423 = vrot.slane %v419, %v422
  %v424 = vmul.f32 %v12, %v423
  %425 = vst [vmem:[%s1 + $0x130] sm:$0xff] %v424
  %v426 = vld [vmem:[%s0 + $0x2f] sm:$0x1]
  %v427 = vlaneseq
  %v428 = vshrl.u32 %v427, 7
  %v429 = vsub.s32 0, %v428
  %v430 = vrot.slane %v426, %v429
  %v431 = vld [vmem:[%s0 + $0x37] sm:$0x1]
  %v432 = vlaneseq
  %v433 = vshrl.u32 %v432, 7
  %v434 = vsub.s32 0, %v433
  %v435 = vrot.slane %v431, %v434
  %v436 = vld [vmem:[%s0 + $0x3f] sm:$0x1]
  %v437 = vlaneseq
  %v438 = vshrl.u32 %v437, 7
  %v439 = vsub.s32 0, %v438
  %v440 = vrot.slane %v436, %v439
  %v441 = vld [vmem:[%s0 + $0x47] sm:$0x1]
  %v442 = vlaneseq
  %v443 = vshrl.u32 %v442, 7
  %v444 = vsub.s32 0, %v443
  %v445 = vrot.slane %v441, %v444
  %v446 = vmul.f32 %v8, %v430
  %v447 = vmul.f32 %v9, %v435
  %v448 = vadd.f32 %v446, %v447
  %v449 = vmul.f32 %v10, %v440
  %v450 = vadd.f32 %v448, %v449
  %v451 = vmul.f32 %v11, %v445
  %v452 = vadd.f32 %v450, %v451
  %453 = vst [vmem:[%s1 + $0xe0] sm:$0xff] %v452
  %v454 = vmul.f32 %v9, %v430
  %v455 = vmul.f32 %v11, %v440
  %v456 = vadd.f32 %v454, %v455
  %v457 = vmul.f32 %v8, %v435
  %v458 = vsub.f32 %v456, %v457
  %v459 = vmul.f32 %v10, %v445
  %v460 = vsub.f32 %v458, %v459
  %461 = vst [vmem:[%s1 + $0xe8] sm:$0xff] %v460
  %v462 = vmul.f32 %v9, %v445
  %v463 = vmul.f32 %v10, %v430
  %v464 = vadd.f32 %v462, %v463
  %v465 = vmul.f32 %v8, %v440
  %v466 = vsub.f32 %v464, %v465
  %v467 = vmul.f32 %v11, %v435
  %v468 = vsub.f32 %v466, %v467
  %469 = vst [vmem:[%s1 + $0xf0] sm:$0xff] %v468
  %v470 = vmul.f32 %v10, %v435
  %v471 = vmul.f32 %v11, %v430
  %v472 = vadd.f32 %v470, %v471
  %v473 = vmul.f32 %v8, %v445
  %v474 = vsub.f32 %v472, %v473
  %v475 = vmul.f32 %v9, %v440
  %v476 = vsub.f32 %v474, %v475
  %477 = vst [vmem:[%s1 + $0xf8] sm:$0xff] %v476
  %v478 = vld [vmem:[%s0 + $0x4f] sm:$0x1]
  %v479 = vlaneseq
  %v480 = vshrl.u32 %v479, 7
  %v481 = vsub.s32 0, %v480
  %v482 = vrot.slane %v478, %v481
  %v483 = vmul.f32 %v12, %v482
  %484 = vst [vmem:[%s1 + $0x138] sm:$0xff] %v483
  // Predicated region
  $region6: #{quaternion_relative_measure_map_weights_product_prior.1} parent=0 // pred_check
    _
  $region7: #{quaternion_relative_measure_map_weights_product_prior.1} parent=0 // pred_check_branch
    %486 = sbr.rel (0) target = $region9
  $region8: #{quaternion_relative_measure_map_weights_product_prior.1} parent=0 // pred_region
    _
  $region9: #{quaternion_relative_measure_map_weights_product_prior.1} parent=0 // pred_fallthru
    _
  // Predicated region
  $region10: #{quaternion_relative_measure_map_weights_product_prior.1} parent=0 // pred_check
    _
  $region11: #{quaternion_relative_measure_map_weights_product_prior.1} parent=0 // pred_check_branch
    %488 = sbr.rel (0) target = $region13
  $region12: #{quaternion_relative_measure_map_weights_product_prior.1} parent=0 // pred_region
    _
  $region13: #{quaternion_relative_measure_map_weights_product_prior.1} parent=0 // pred_fallthru
    _

</llo_original>
